<compile_context>
chip_gen: v5e
topology: v5e:2x2
jax: 0.10.0
libtpu: 0.0.40
codegen_flags: <defaults>
</compile_context>

<pallas_src>
import functools

import jax
import jax.numpy as jnp
from jax.experimental import pallas as pl
from jax.experimental.pallas import tpu as pltpu


def _round_up(x, m):
    return ((x + m - 1) // m) * m


def _mlp_kernel(x_ref, w_in_ref, b_in_ref, w_h_ref, b_h_ref, w_out_ref, b_out_ref,
                o_ref, *, layer_num):
    # Input linear (no activation, matching nn.Sequential ordering).
    # x / w_in are bf16; accumulate in f32.
    h = jnp.dot(x_ref[...], w_in_ref[...],
                preferred_element_type=jnp.float32) + b_in_ref[...]

    # Hidden layers: Linear -> Tanh, one layer's weights read per iteration
    # (keeps the live set to a single (Hp, Hp) tile instead of the full stack).
    for i in range(layer_num):
        w_i = w_h_ref[i]                      # (Hp, Hp) bf16, per-layer ref read
        b_i = b_h_ref[i]                      # (1, Hp)  f32
        z = jnp.dot(h.astype(w_i.dtype), w_i,
                    preferred_element_type=jnp.float32) + b_i
        h = jnp.tanh(z)                       # tanh in f32 (EUP, no bf16 path on v5e)

    # Output linear.
    out = jnp.dot(h.astype(w_out_ref.dtype), w_out_ref[...],
                  preferred_element_type=jnp.float32) + b_out_ref[...]
    o_ref[...] = out.astype(o_ref.dtype)


def mlp_pallas(x, params, *, layer_num, max_tile_b=256,
               compute_dtype=jnp.bfloat16):
    """x: (B, input_dim) f32. params: dict of (in, out)-layout f32 weights/biases."""
    B, input_dim = x.shape
    hidden_dim = params["w_in"].shape[1]
    output_dim = params["w_out"].shape[1]

    # Lane-dense padded feature dims (multiples of 128).
    Ip = _round_up(input_dim, 128)
    Hp = _round_up(hidden_dim, 128)
    Op = _round_up(output_dim, 128)

    # Batch tiling: up to max_tile_b rows per grid step, sublane-aligned.
    tile_b = min(max_tile_b, _round_up(B, 8))
    Bp = _round_up(B, tile_b)

    # Zero-pad + cast. Zero padding is exact: padded hidden columns get
    # 0*w + 0 bias -> tanh(0) = 0, and padded output columns are sliced off.
    x_p = jnp.zeros((Bp, Ip), compute_dtype).at[:B, :input_dim].set(
        x.astype(compute_dtype))
    w_in = jnp.zeros((Ip, Hp), compute_dtype).at[:input_dim, :hidden_dim].set(
        params["w_in"].astype(compute_dtype))
    b_in = jnp.zeros((1, Hp), jnp.float32).at[:, :hidden_dim].set(
        params["b_in"].astype(jnp.float32).reshape(1, hidden_dim))
    w_h = jnp.zeros((layer_num, Hp, Hp), compute_dtype).at[
        :, :hidden_dim, :hidden_dim].set(params["w_h"].astype(compute_dtype))
    b_h = jnp.zeros((layer_num, 1, Hp), jnp.float32).at[:, 0, :hidden_dim].set(
        params["b_h"].astype(jnp.float32))
    w_out = jnp.zeros((Hp, Op), compute_dtype).at[:hidden_dim, :output_dim].set(
        params["w_out"].astype(compute_dtype))
    b_out = jnp.zeros((1, Op), jnp.float32).at[:, :output_dim].set(
        params["b_out"].astype(jnp.float32).reshape(1, output_dim))

    kernel = functools.partial(_mlp_kernel, layer_num=layer_num)
    grid = (Bp // tile_b,)

    # Explicit VMEM budget: resident weight stack + double-buffered act tiles.
    weight_bytes = 2 * (Ip * Hp + layer_num * Hp * Hp + Hp * Op)      # bf16
    bias_bytes = 4 * (Hp + layer_num * Hp + Op)                        # f32
    act_bytes = 2 * tile_b * (2 * Ip + 4 * Op)                         # dbl-buffered
    vmem_bytes = int(min(100 * 1024 * 1024,
                         max(32 * 1024 * 1024,
                             4 * (weight_bytes + bias_bytes + act_bytes))))

    out_padded = pl.pallas_call(
        kernel,
        out_shape=jax.ShapeDtypeStruct((Bp, Op), jnp.float32),
        grid_spec=pltpu.PrefetchScalarGridSpec(
            num_scalar_prefetch=0,
            grid=grid,
            in_specs=[
                pl.BlockSpec((tile_b, Ip), lambda i: (i, 0)),            # x tile
                pl.BlockSpec((Ip, Hp), lambda i: (0, 0)),                # w_in
                pl.BlockSpec((1, Hp), lambda i: (0, 0)),                 # b_in
                pl.BlockSpec((layer_num, Hp, Hp), lambda i: (0, 0, 0)),  # w_h stack
                pl.BlockSpec((layer_num, 1, Hp), lambda i: (0, 0, 0)),   # b_h stack
                pl.BlockSpec((Hp, Op), lambda i: (0, 0)),                # w_out
                pl.BlockSpec((1, Op), lambda i: (0, 0)),                 # b_out
            ],
            out_specs=pl.BlockSpec((tile_b, Op), lambda i: (i, 0)),
        ),
        compiler_params=pltpu.CompilerParams(
            dimension_semantics=("parallel",),
            vmem_limit_bytes=vmem_bytes),
    )(x_p, w_in, b_in, w_h, b_h, w_out, b_out)

    return out_padded[:B, :output_dim].astype(x.dtype)


def init_params(key, input_dim, hidden_dim, output_dim, layer_num):
    ks = jax.random.split(key, 6)
    scale = 0.1
    return {
        # stored as (in, out) so the kernel computes x @ W directly
        "w_in": scale * jax.random.normal(ks[0], (input_dim, hidden_dim), jnp.float32),
        "b_in": scale * jax.random.normal(ks[1], (1, hidden_dim), jnp.float32),
        "w_h": scale * jax.random.normal(ks[2], (layer_num, hidden_dim, hidden_dim), jnp.float32),
        "b_h": scale * jax.random.normal(ks[3], (layer_num, hidden_dim), jnp.float32),
        "w_out": scale * jax.random.normal(ks[4], (hidden_dim, output_dim), jnp.float32),
        "b_out": scale * jax.random.normal(ks[5], (1, output_dim), jnp.float32),
    }


def mlp_reference(x, params, layer_num):
    h = x @ params["w_in"] + params["b_in"]
    for i in range(layer_num):
        h = jnp.tanh(h @ params["w_h"][i] + params["b_h"][i])
    return h @ params["w_out"] + params["b_out"]


if __name__ == "__main__":
    batch, input_dim, hidden_dim, output_dim, layer_num = 8, 32, 32, 16, 2

    key = jax.random.PRNGKey(0)
    kx, kp = jax.random.split(key)
    x = jax.random.normal(kx, (batch, input_dim), jnp.float32)
    params = init_params(kp, input_dim, hidden_dim, output_dim, layer_num)

    out = mlp_pallas(x, params, layer_num=layer_num)
    out = jax.block_until_ready(out)

    ref = mlp_reference(x, params, layer_num)
    assert out.shape == (batch, output_dim)
    # bf16 MXU inputs with f32 accumulation -> loosened tolerance vs f32 reference.
    assert jnp.allclose(out, ref, atol=3e-2, rtol=3e-2), "mismatch vs reference"

    print("KERNEL_OK")
</pallas_src>

<mosaic_0001>
module attributes {stable_mosaic.version = 11 : i64} {
  func.func @_mlp_kernel(%arg0: i32, %arg1: memref<8x128xbf16, #tpu.memory_space<vmem>>, %arg2: memref<128x128xbf16, #tpu.memory_space<vmem>>, %arg3: memref<1x128xf32, #tpu.memory_space<vmem>>, %arg4: memref<2x128x128xbf16, #tpu.memory_space<vmem>>, %arg5: memref<2x1x128xf32, #tpu.memory_space<vmem>>, %arg6: memref<128x128xbf16, #tpu.memory_space<vmem>>, %arg7: memref<1x128xf32, #tpu.memory_space<vmem>>, %arg8: memref<8x128xf32, #tpu.memory_space<vmem>>) attributes {dimension_semantics = [#tpu.dimension_semantics<parallel>], iteration_bounds = array<i64: 1>, scalar_prefetch = 0 : i64, scratch_operands = 0 : i64, tpu.core_type = #tpu.core_type<tc>, window_params = [{transform_indices = @transform_0, window_bounds = array<i64: 8, 128>}, {pipeline_mode = #tpu.pipeline_mode<synchronous>, transform_indices = @transform_1, window_bounds = array<i64: 128, 128>}, {pipeline_mode = #tpu.pipeline_mode<synchronous>, transform_indices = @transform_2, window_bounds = array<i64: 1, 128>}, {pipeline_mode = #tpu.pipeline_mode<synchronous>, transform_indices = @transform_3, window_bounds = array<i64: 2, 128, 128>}, {pipeline_mode = #tpu.pipeline_mode<synchronous>, transform_indices = @transform_4, window_bounds = array<i64: 2, 1, 128>}, {pipeline_mode = #tpu.pipeline_mode<synchronous>, transform_indices = @transform_5, window_bounds = array<i64: 128, 128>}, {pipeline_mode = #tpu.pipeline_mode<synchronous>, transform_indices = @transform_6, window_bounds = array<i64: 1, 128>}, {transform_indices = @transform_7, window_bounds = array<i64: 8, 128>}]} {
    %c0 = arith.constant 0 : index
    %c0_0 = arith.constant 0 : index
    %0 = vector.load %arg1[%c0, %c0_0] : memref<8x128xbf16, #tpu.memory_space<vmem>>, vector<8x128xbf16>
    %c0_1 = arith.constant 0 : index
    %c0_2 = arith.constant 0 : index
    %1 = vector.load %arg2[%c0_1, %c0_2] : memref<128x128xbf16, #tpu.memory_space<vmem>>, vector<128x128xbf16>
    %cst = arith.constant dense<0.000000e+00> : vector<8x128xf32>
    %2 = tpu.matmul %0, %1, %cst {dimension_numbers = #tpu.dot_dimension_numbers<[1], [0], [0], [1], [0, 0, 1, 1], [], []>} : vector<8x128xbf16>, vector<128x128xbf16>, vector<8x128xf32> -> vector<8x128xf32>
    %c0_3 = arith.constant 0 : index
    %c0_4 = arith.constant 0 : index
    %3 = vector.load %arg3[%c0_3, %c0_4] : memref<1x128xf32, #tpu.memory_space<vmem>>, vector<1x128xf32>
    %4 = vector.broadcast %3 : vector<1x128xf32> to vector<8x128xf32>
    %5 = arith.addf %2, %4 : vector<8x128xf32>
    %c0_5 = arith.constant 0 : index
    %c0_6 = arith.constant 0 : index
    %c0_7 = arith.constant 0 : index
    %6 = vector.load %arg4[%c0_5, %c0_6, %c0_7] : memref<2x128x128xbf16, #tpu.memory_space<vmem>>, vector<1x128x128xbf16>
    %7 = vector.shape_cast %6 : vector<1x128x128xbf16> to vector<128x128xbf16>
    %c0_8 = arith.constant 0 : index
    %c0_9 = arith.constant 0 : index
    %c0_10 = arith.constant 0 : index
    %8 = vector.load %arg5[%c0_8, %c0_9, %c0_10] : memref<2x1x128xf32, #tpu.memory_space<vmem>>, vector<1x1x128xf32>
    %9 = vector.shape_cast %8 : vector<1x1x128xf32> to vector<1x128xf32>
    %10 = arith.truncf %5 : vector<8x128xf32> to vector<8x128xbf16>
    %cst_11 = arith.constant dense<0.000000e+00> : vector<8x128xf32>
    %11 = tpu.matmul %10, %7, %cst_11 {dimension_numbers = #tpu.dot_dimension_numbers<[1], [0], [0], [1], [0, 0, 1, 1], [], []>} : vector<8x128xbf16>, vector<128x128xbf16>, vector<8x128xf32> -> vector<8x128xf32>
    %12 = vector.broadcast %9 : vector<1x128xf32> to vector<8x128xf32>
    %13 = arith.addf %11, %12 : vector<8x128xf32>
    %14 = math.tanh %13 : vector<8x128xf32>
    %c1 = arith.constant 1 : index
    %c0_12 = arith.constant 0 : index
    %c0_13 = arith.constant 0 : index
    %15 = vector.load %arg4[%c1, %c0_12, %c0_13] : memref<2x128x128xbf16, #tpu.memory_space<vmem>>, vector<1x128x128xbf16>
    %16 = vector.shape_cast %15 : vector<1x128x128xbf16> to vector<128x128xbf16>
    %c1_14 = arith.constant 1 : index
    %c0_15 = arith.constant 0 : index
    %c0_16 = arith.constant 0 : index
    %17 = vector.load %arg5[%c1_14, %c0_15, %c0_16] : memref<2x1x128xf32, #tpu.memory_space<vmem>>, vector<1x1x128xf32>
    %18 = vector.shape_cast %17 : vector<1x1x128xf32> to vector<1x128xf32>
    %19 = arith.truncf %14 : vector<8x128xf32> to vector<8x128xbf16>
    %cst_17 = arith.constant dense<0.000000e+00> : vector<8x128xf32>
    %20 = tpu.matmul %19, %16, %cst_17 {dimension_numbers = #tpu.dot_dimension_numbers<[1], [0], [0], [1], [0, 0, 1, 1], [], []>} : vector<8x128xbf16>, vector<128x128xbf16>, vector<8x128xf32> -> vector<8x128xf32>
    %21 = vector.broadcast %18 : vector<1x128xf32> to vector<8x128xf32>
    %22 = arith.addf %20, %21 : vector<8x128xf32>
    %23 = math.tanh %22 : vector<8x128xf32>
    %24 = arith.truncf %23 : vector<8x128xf32> to vector<8x128xbf16>
    %c0_18 = arith.constant 0 : index
    %c0_19 = arith.constant 0 : index
    %25 = vector.load %arg6[%c0_18, %c0_19] : memref<128x128xbf16, #tpu.memory_space<vmem>>, vector<128x128xbf16>
    %cst_20 = arith.constant dense<0.000000e+00> : vector<8x128xf32>
    %26 = tpu.matmul %24, %25, %cst_20 {dimension_numbers = #tpu.dot_dimension_numbers<[1], [0], [0], [1], [0, 0, 1, 1], [], []>} : vector<8x128xbf16>, vector<128x128xbf16>, vector<8x128xf32> -> vector<8x128xf32>
    %c0_21 = arith.constant 0 : index
    %c0_22 = arith.constant 0 : index
    %27 = vector.load %arg7[%c0_21, %c0_22] : memref<1x128xf32, #tpu.memory_space<vmem>>, vector<1x128xf32>
    %28 = vector.broadcast %27 : vector<1x128xf32> to vector<8x128xf32>
    %29 = arith.addf %26, %28 : vector<8x128xf32>
    %c0_23 = arith.constant 0 : index
    %c0_24 = arith.constant 0 : index
    %30 = vector.load %arg8[%c0_23, %c0_24] : memref<8x128xf32, #tpu.memory_space<vmem>>, vector<8x128xf32>
    tpu.vector_store %arg8[%c0_23, %c0_24], %29 {strides = array<i32>} : memref<8x128xf32, #tpu.memory_space<vmem>>, vector<8x128xf32>,
    return
  }
  func.func @transform_0(%arg0: i32) -> (i32, i32) {
    %c0_i32 = arith.constant 0 : i32
    %c0_i32_0 = arith.constant 0 : i32
    return %arg0, %c0_i32 : i32, i32
  }
  func.func @transform_1(%arg0: i32) -> (i32, i32) {
    %c0_i32 = arith.constant 0 : i32
    %c0_i32_0 = arith.constant 0 : i32
    %c0_i32_1 = arith.constant 0 : i32
    return %c0_i32, %c0_i32_0 : i32, i32
  }
  func.func @transform_2(%arg0: i32) -> (i32, i32) {
    %c0_i32 = arith.constant 0 : i32
    %c0_i32_0 = arith.constant 0 : i32
    %c0_i32_1 = arith.constant 0 : i32
    return %c0_i32, %c0_i32_0 : i32, i32
  }
  func.func @transform_3(%arg0: i32) -> (i32, i32, i32) {
    %c0_i32 = arith.constant 0 : i32
    %c0_i32_0 = arith.constant 0 : i32
    %c0_i32_1 = arith.constant 0 : i32
    %c0_i32_2 = arith.constant 0 : i32
    return %c0_i32, %c0_i32_0, %c0_i32_1 : i32, i32, i32
  }
  func.func @transform_4(%arg0: i32) -> (i32, i32, i32) {
    %c0_i32 = arith.constant 0 : i32
    %c0_i32_0 = arith.constant 0 : i32
    %c0_i32_1 = arith.constant 0 : i32
    %c0_i32_2 = arith.constant 0 : i32
    return %c0_i32, %c0_i32_0, %c0_i32_1 : i32, i32, i32
  }
  func.func @transform_5(%arg0: i32) -> (i32, i32) {
    %c0_i32 = arith.constant 0 : i32
    %c0_i32_0 = arith.constant 0 : i32
    %c0_i32_1 = arith.constant 0 : i32
    return %c0_i32, %c0_i32_0 : i32, i32
  }
  func.func @transform_6(%arg0: i32) -> (i32, i32) {
    %c0_i32 = arith.constant 0 : i32
    %c0_i32_0 = arith.constant 0 : i32
    %c0_i32_1 = arith.constant 0 : i32
    return %c0_i32, %c0_i32_0 : i32, i32
  }
  func.func @transform_7(%arg0: i32) -> (i32, i32) {
    %c0_i32 = arith.constant 0 : i32
    %c0_i32_0 = arith.constant 0 : i32
    return %arg0, %c0_i32 : i32, i32
  }
}

</mosaic_0001>

<llo_original>
// kernel: tpu_custom_call.1
$region0: #{tpu_custom_call.1}
  #allocation0 [shape = 'u32[]', space=smem, size = 0x4, offset = 0x4, fixed_abs, tag = 'smem constant byte address 0x4 - core index']
  #allocation1 [shape = 'u32[72,128]{1,0:T(1,128)}', space=vmem, size = 0x9000, scoped, tag = 'internal scratch']
  %s0 = inlined_call_operand.hbm [shape: bf16[8,128], index: 0, kind: input, shape index: {}]
  %s1 = inlined_call_operand.hbm [shape: bf16[128,128], index: 1, kind: input, shape index: {}]
  %s2 = inlined_call_operand.vmem [shape: f32[1,128], index: 2, kind: input, shape index: {}]
  %s3 = inlined_call_operand.hbm [shape: bf16[2,128,128], index: 3, kind: input, shape index: {}]
  %s4 = inlined_call_operand.vmem [shape: f32[2,1,128], index: 4, kind: input, shape index: {}]
  %s5 = inlined_call_operand.hbm [shape: bf16[128,128], index: 5, kind: input, shape index: {}]
  %s6 = inlined_call_operand.vmem [shape: f32[1,128], index: 6, kind: input, shape index: {}]
  %s7 = inlined_call_operand.hbm [shape: f32[8,128], index: 7, kind: output, shape index: {}]
  %s8 = sld [smem:[#allocation0]]
  $region54: #{tpu_custom_call.1} parent=0
    _
  %s10 = ssub.s32 1, %s8
  %s11 = scalar_select 0, %s10, %s8
  $region1: #{tpu_custom_call.1} parent=0
    #allocation2 [shape = 'u8[2048]{0}', space=vmem, size = 0x800, scoped, tag = 'input window, operand 0, single buffered']
    #allocation3 [shape = 's32[1]{0}', space=sflag, size = 0x4, scoped, tag = 'scoped memory for tpu_custom_call.1']
    #allocation4 [shape = 's32[1]{0}', space=sflag, size = 0x4, scoped, tag = 'scoped memory for tpu_custom_call.1']
    #allocation5 [shape = 'u8[32768]{0}', space=vmem, size = 0x8000, scoped, tag = 'input window, operand 1, single buffered']
    #allocation6 [shape = 's32[1]{0}', space=sflag, size = 0x4, scoped, tag = 'scoped memory for tpu_custom_call.1']
    #allocation7 [shape = 'u8[65536]{0}', space=vmem, size = 0x10000, scoped, tag = 'input window, operand 3, single buffered']
    #allocation8 [shape = 'u8[32768]{0}', space=vmem, size = 0x8000, scoped, tag = 'input window, operand 5, single buffered']
    #allocation9 [shape = 's32[1]{0}', space=sflag, size = 0x4, scoped, tag = 'scoped memory for tpu_custom_call.1']
    #allocation10 [shape = 'u8[4096]{0}', space=vmem, size = 0x1000, scoped, tag = 'output window, operand 0, single buffered']
    %12 = vsyncpa [#allocation3], 0
    %13 = vsyncpa [#allocation6], 0
    %14 = vsyncpa [#allocation9], 0
    %15 = vsyncpa [#allocation4], 0
    // Predicated region
    $region2: #{tpu_custom_call.1} parent=1 // pred_check
      _
    $region3: #{tpu_custom_call.1} parent=1 // pred_check_branch
      %17 = sbr.rel (0) target = $region5
    $region4: #{tpu_custom_call.1} parent=1 // pred_region
      %19 = vsyncadd [#allocation3], 0
      %s21 = sshll.u32 %s0, 4
      %s22 = int_to_ptr.hbm [resolvable:$true] %s21
      %s23 = sshll.u32 [#allocation2], 4
      %s24 = int_to_ptr.vmem [resolvable:$true] %s23
      %26 = dma.hbm_to_vmem [thread:$0]  %s22, 64, %s24, [#allocation3]
    $region5: #{tpu_custom_call.1} parent=1 // pred_fallthru
      _
    // Predicated region
    $region6: #{tpu_custom_call.1} parent=1 // pred_check
      _
    $region7: #{tpu_custom_call.1} parent=1 // pred_check_branch
      %28 = sbr.rel (0) target = $region9
    $region8: #{tpu_custom_call.1} parent=1 // pred_region
      %30 = vsyncadd [#allocation6], 0
      %s31 = sshll.u32 %s1, 4
      %s32 = int_to_ptr.hbm [resolvable:$true] %s31
      %s33 = sshll.u32 [#allocation5], 4
      %s34 = int_to_ptr.vmem [resolvable:$true] %s33
      %39 = dma.hbm_to_vmem [thread:$0]  %s32, 1024, %s34, [#allocation6], 64, 64, 4
    $region9: #{tpu_custom_call.1} parent=1 // pred_fallthru
      _
    // Predicated region
    $region10: #{tpu_custom_call.1} parent=1 // pred_check
      _
    $region11: #{tpu_custom_call.1} parent=1 // pred_check_branch
      %41 = sbr.rel (0) target = $region13
    $region12: #{tpu_custom_call.1} parent=1 // pred_region
      _
    $region13: #{tpu_custom_call.1} parent=1 // pred_fallthru
      _
    // Predicated region
    $region14: #{tpu_custom_call.1} parent=1 // pred_check
      _
    $region15: #{tpu_custom_call.1} parent=1 // pred_check_branch
      %43 = sbr.rel (0) target = $region17
    $region16: #{tpu_custom_call.1} parent=1 // pred_region
      %45 = vsyncadd [#allocation6], 0
      %s46 = sshll.u32 %s3, 4
      %s47 = int_to_ptr.hbm [resolvable:$true] %s46
      %s48 = sshll.u32 [#allocation7], 4
      %s49 = int_to_ptr.vmem [resolvable:$true] %s48
      %54 = dma.hbm_to_vmem [thread:$0]  %s47, 2048, %s49, [#allocation6], 64, 64, 4
    $region17: #{tpu_custom_call.1} parent=1 // pred_fallthru
      _
    // Predicated region
    $region18: #{tpu_custom_call.1} parent=1 // pred_check
      _
    $region19: #{tpu_custom_call.1} parent=1 // pred_check_branch
      %56 = sbr.rel (0) target = $region21
    $region20: #{tpu_custom_call.1} parent=1 // pred_region
      _
    $region21: #{tpu_custom_call.1} parent=1 // pred_fallthru
      _
    // Predicated region
    $region22: #{tpu_custom_call.1} parent=1 // pred_check
      _
    $region23: #{tpu_custom_call.1} parent=1 // pred_check_branch
      %58 = sbr.rel (0) target = $region25
    $region24: #{tpu_custom_call.1} parent=1 // pred_region
      %60 = vsyncadd [#allocation9], 0
      %s61 = sshll.u32 %s5, 4
      %s62 = int_to_ptr.hbm [resolvable:$true] %s61
      %s63 = sshll.u32 [#allocation8], 4
      %s64 = int_to_ptr.vmem [resolvable:$true] %s63
      %69 = dma.hbm_to_vmem [thread:$0]  %s62, 1024, %s64, [#allocation9], 64, 64, 4
    $region25: #{tpu_custom_call.1} parent=1 // pred_fallthru
      _
    // Predicated region
    $region26: #{tpu_custom_call.1} parent=1 // pred_check
      _
    $region27: #{tpu_custom_call.1} parent=1 // pred_check_branch
      %71 = sbr.rel (0) target = $region29
    $region28: #{tpu_custom_call.1} parent=1 // pred_region
      _
    $region29: #{tpu_custom_call.1} parent=1 // pred_fallthru
      _
    // Predicated region
    $region30: #{tpu_custom_call.1} parent=1 // pred_check
      _
    $region31: #{tpu_custom_call.1} parent=1 // pred_check_branch
      %73 = sbr.rel (0) target = $region33
    $region32: #{tpu_custom_call.1} parent=1 // pred_region
      %75 = dma.done [#allocation3], 64
    $region33: #{tpu_custom_call.1} parent=1 // pred_fallthru
      _
    // Predicated region
    $region34: #{tpu_custom_call.1} parent=1 // pred_check
      _
    $region35: #{tpu_custom_call.1} parent=1 // pred_check_branch
      %77 = sbr.rel (0) target = $region37
    $region36: #{tpu_custom_call.1} parent=1 // pred_region
      %79 = dma.done [#allocation6], 1024
    $region37: #{tpu_custom_call.1} parent=1 // pred_fallthru
      _
    // Predicated region
    $region38: #{tpu_custom_call.1} parent=1 // pred_check
      _
    $region39: #{tpu_custom_call.1} parent=1 // pred_check_branch
      %81 = sbr.rel (0) target = $region41
    $region40: #{tpu_custom_call.1} parent=1 // pred_region
      %83 = dma.done [#allocation6], 2048
    $region41: #{tpu_custom_call.1} parent=1 // pred_fallthru
      _
    // Predicated region
    $region42: #{tpu_custom_call.1} parent=1 // pred_check
      _
    $region43: #{tpu_custom_call.1} parent=1 // pred_check_branch
      %85 = sbr.rel (0) target = $region45
    $region44: #{tpu_custom_call.1} parent=1 // pred_region
      %87 = dma.done [#allocation9], 1024
    $region45: #{tpu_custom_call.1} parent=1 // pred_fallthru
      _
    %v88 = vld [vmem:[#allocation2] sm:$0xf]
    %v89 = vld [vmem:[#allocation5] sm:$0xf]
    %v90 = vld [vmem:[#allocation5 + $0x4] sm:$0xf]
    %v91 = vld [vmem:[#allocation5 + $0x8] sm:$0xf]
    %v92 = vld [vmem:[#allocation5 + $0xc] sm:$0xf]
    %v93 = vld [vmem:[#allocation5 + $0x10] sm:$0xf]
    %v94 = vld [vmem:[#allocation5 + $0x14] sm:$0xf]
    %v95 = vld [vmem:[#allocation5 + $0x18] sm:$0xf]
    %v96 = vld [vmem:[#allocation5 + $0x1c] sm:$0xf]
    %v97 = vld [vmem:[#allocation5 + $0x20] sm:$0xf]
    %v98 = vld [vmem:[#allocation5 + $0x24] sm:$0xf]
    %v99 = vld [vmem:[#allocation5 + $0x28] sm:$0xf]
    %v100 = vld [vmem:[#allocation5 + $0x2c] sm:$0xf]
    %v101 = vld [vmem:[#allocation5 + $0x30] sm:$0xf]
    %v102 = vld [vmem:[#allocation5 + $0x34] sm:$0xf]
    %v103 = vld [vmem:[#allocation5 + $0x38] sm:$0xf]
    %v104 = vld [vmem:[#allocation5 + $0x3c] sm:$0xf]
    %v105 = vld [vmem:[%s2] sm:$0x1]
    %v107 = vperm.slane %v105, 0
    %v125 = vunpack.c.l.b16 %v89
    %v126 = vunpack.c.l.b16 %v90
    %v127 = vunpack.c.l.b16 %v91
    %v128 = vunpack.c.l.b16 %v92
    %v129 = vunpack.c.l.b16 %v93
    %v130 = vunpack.c.l.b16 %v94
    %v131 = vunpack.c.l.b16 %v95
    %v132 = vunpack.c.l.b16 %v96
    %v133 = vunpack.c.l.b16 %v97
    %v134 = vunpack.c.l.b16 %v98
    %v135 = vunpack.c.l.b16 %v99
    %v136 = vunpack.c.l.b16 %v100
    %v137 = vunpack.c.l.b16 %v101
    %v138 = vunpack.c.l.b16 %v102
    %v139 = vunpack.c.l.b16 %v103
    %v140 = vunpack.c.l.b16 %v104
    %v141 = vpack.c.b16 %v126, %v125
    %v142 = vpack.c.b16 %v128, %v127
    %v143 = vpack.c.b16 %v130, %v129
    %v144 = vpack.c.b16 %v132, %v131
    %v145 = vpack.c.b16 %v134, %v133
    %v146 = vpack.c.b16 %v136, %v135
    %v147 = vpack.c.b16 %v138, %v137
    %v148 = vpack.c.b16 %v140, %v139
    %157 = vmatpush.bf16.msra.mxu0 %v148
    %158 = vmatpush.bf16.msra.mxu0 %v147
    %159 = vmatpush.bf16.msra.mxu0 %v146
    %160 = vmatpush.bf16.msra.mxu0 %v145
    %161 = vmatpush.bf16.msra.mxu0 %v144
    %162 = vmatpush.bf16.msra.mxu0 %v143
    %163 = vmatpush.bf16.msra.mxu0 %v142
    %164 = vmatpush.bf16.msra.mxu0 %v141
    %165 = vmatmul.bf16.gmra.mxu0 %v88
    %v166 = vpop.f32.mrf.mxu0
    %v167 = vadd.f32 %v107, %v166
    %v168 = vpop.f32.mrf.mxu0
    %169 = vdwg.mxu0
    %v170 = vld [vmem:[#allocation7] sm:$0xf]
    %v171 = vld [vmem:[#allocation7 + $0x4] sm:$0xf]
    %v172 = vld [vmem:[#allocation7 + $0x8] sm:$0xf]
    %v173 = vld [vmem:[#allocation7 + $0xc] sm:$0xf]
    %v174 = vld [vmem:[#allocation7 + $0x10] sm:$0xf]
    %v175 = vld [vmem:[#allocation7 + $0x14] sm:$0xf]
    %v176 = vld [vmem:[#allocation7 + $0x18] sm:$0xf]
    %v177 = vld [vmem:[#allocation7 + $0x1c] sm:$0xf]
    %v178 = vld [vmem:[#allocation7 + $0x20] sm:$0xf]
    %v179 = vld [vmem:[#allocation7 + $0x24] sm:$0xf]
    %v180 = vld [vmem:[#allocation7 + $0x28] sm:$0xf]
    %v181 = vld [vmem:[#allocation7 + $0x2c] sm:$0xf]
    %v182 = vld [vmem:[#allocation7 + $0x30] sm:$0xf]
    %v183 = vld [vmem:[#allocation7 + $0x34] sm:$0xf]
    %v184 = vld [vmem:[#allocation7 + $0x38] sm:$0xf]
    %v185 = vld [vmem:[#allocation7 + $0x3c] sm:$0xf]
    %v186 = vld [vmem:[%s4] sm:$0x1]
    %v187 = vpack.c.bf16 %v167, %v167
    %v189 = vperm.slane %v186, 0
    %v207 = vunpack.c.l.b16 %v170
    %v208 = vunpack.c.l.b16 %v171
    %v209 = vunpack.c.l.b16 %v172
    %v210 = vunpack.c.l.b16 %v173
    %v211 = vunpack.c.l.b16 %v174
    %v212 = vunpack.c.l.b16 %v175
    %v213 = vunpack.c.l.b16 %v176
    %v214 = vunpack.c.l.b16 %v177
    %v215 = vunpack.c.l.b16 %v178
    %v216 = vunpack.c.l.b16 %v179
    %v217 = vunpack.c.l.b16 %v180
    %v218 = vunpack.c.l.b16 %v181
    %v219 = vunpack.c.l.b16 %v182
    %v220 = vunpack.c.l.b16 %v183
    %v221 = vunpack.c.l.b16 %v184
    %v222 = vunpack.c.l.b16 %v185
    %v223 = vpack.c.b16 %v208, %v207
    %v224 = vpack.c.b16 %v210, %v209
    %v225 = vpack.c.b16 %v212, %v211
    %v226 = vpack.c.b16 %v214, %v213
    %v227 = vpack.c.b16 %v216, %v215
    %v228 = vpack.c.b16 %v218, %v217
    %v229 = vpack.c.b16 %v220, %v219
    %v230 = vpack.c.b16 %v222, %v221
    %239 = vmatpush.bf16.msra.mxu0 %v230
    %240 = vmatpush.bf16.msra.mxu0 %v229
    %241 = vmatpush.bf16.msra.mxu0 %v228
    %242 = vmatpush.bf16.msra.mxu0 %v227
    %243 = vmatpush.bf16.msra.mxu0 %v226
    %244 = vmatpush.bf16.msra.mxu0 %v225
    %245 = vmatpush.bf16.msra.mxu0 %v224
    %246 = vmatpush.bf16.msra.mxu0 %v223
    %247 = vmatmul.bf16.gmra.mxu0 %v187
    %v248 = vpop.f32.mrf.mxu0
    %v249 = vadd.f32 %v189, %v248
    %v250 = vpop.f32.mrf.mxu0
    %251 = vdwg.mxu0
    %v252 = vtanh.pop %v249
    %s253 = scalar_lea.vmem [#allocation7], 64
    %v254 = vld [vmem:[%s253] sm:$0xf]
    %v255 = vld [vmem:[%s253 + $0x4] sm:$0xf]
    %v256 = vld [vmem:[%s253 + $0x8] sm:$0xf]
    %v257 = vld [vmem:[%s253 + $0xc] sm:$0xf]
    %v258 = vld [vmem:[%s253 + $0x10] sm:$0xf]
    %v259 = vld [vmem:[%s253 + $0x14] sm:$0xf]
    %v260 = vld [vmem:[%s253 + $0x18] sm:$0xf]
    %v261 = vld [vmem:[%s253 + $0x1c] sm:$0xf]
    %v262 = vld [vmem:[%s253 + $0x20] sm:$0xf]
    %v263 = vld [vmem:[%s253 + $0x24] sm:$0xf]
    %v264 = vld [vmem:[%s253 + $0x28] sm:$0xf]
    %v265 = vld [vmem:[%s253 + $0x2c] sm:$0xf]
    %v266 = vld [vmem:[%s253 + $0x30] sm:$0xf]
    %v267 = vld [vmem:[%s253 + $0x34] sm:$0xf]
    %v268 = vld [vmem:[%s253 + $0x38] sm:$0xf]
    %v269 = vld [vmem:[%s253 + $0x3c] sm:$0xf]
    %s270 = scalar_lea.vmem %s4, 1
    %v271 = vld [vmem:[%s270] sm:$0x1]
    %v272 = vpack.c.bf16 %v252, %v252
    %v274 = vperm.slane %v271, 0
    %v292 = vunpack.c.l.b16 %v254
    %v293 = vunpack.c.l.b16 %v255
    %v294 = vunpack.c.l.b16 %v256
    %v295 = vunpack.c.l.b16 %v257
    %v296 = vunpack.c.l.b16 %v258
    %v297 = vunpack.c.l.b16 %v259
    %v298 = vunpack.c.l.b16 %v260
    %v299 = vunpack.c.l.b16 %v261
    %v300 = vunpack.c.l.b16 %v262
    %v301 = vunpack.c.l.b16 %v263
    %v302 = vunpack.c.l.b16 %v264
    %v303 = vunpack.c.l.b16 %v265
    %v304 = vunpack.c.l.b16 %v266
    %v305 = vunpack.c.l.b16 %v267
    %v306 = vunpack.c.l.b16 %v268
    %v307 = vunpack.c.l.b16 %v269
    %v308 = vpack.c.b16 %v293, %v292
    %v309 = vpack.c.b16 %v295, %v294
    %v310 = vpack.c.b16 %v297, %v296
    %v311 = vpack.c.b16 %v299, %v298
    %v312 = vpack.c.b16 %v301, %v300
    %v313 = vpack.c.b16 %v303, %v302
    %v314 = vpack.c.b16 %v305, %v304
    %v315 = vpack.c.b16 %v307, %v306
    %324 = vmatpush.bf16.msra.mxu0 %v315
    %325 = vmatpush.bf16.msra.mxu0 %v314
    %326 = vmatpush.bf16.msra.mxu0 %v313
    %327 = vmatpush.bf16.msra.mxu0 %v312
    %328 = vmatpush.bf16.msra.mxu0 %v311
    %329 = vmatpush.bf16.msra.mxu0 %v310
    %330 = vmatpush.bf16.msra.mxu0 %v309
    %331 = vmatpush.bf16.msra.mxu0 %v308
    %332 = vmatmul.bf16.gmra.mxu0 %v272
    %v333 = vpop.f32.mrf.mxu0
    %v334 = vadd.f32 %v274, %v333
    %v335 = vpop.f32.mrf.mxu0
    %336 = vdwg.mxu0
    %v337 = vtanh.pop %v334
    %v338 = vpack.c.bf16 %v337, %v337
    %v339 = vld [vmem:[#allocation8] sm:$0xf]
    %v340 = vld [vmem:[#allocation8 + $0x4] sm:$0xf]
    %v341 = vld [vmem:[#allocation8 + $0x8] sm:$0xf]
    %v342 = vld [vmem:[#allocation8 + $0xc] sm:$0xf]
    %v343 = vld [vmem:[#allocation8 + $0x10] sm:$0xf]
    %v344 = vld [vmem:[#allocation8 + $0x14] sm:$0xf]
    %v345 = vld [vmem:[#allocation8 + $0x18] sm:$0xf]
    %v346 = vld [vmem:[#allocation8 + $0x1c] sm:$0xf]
    %v347 = vld [vmem:[#allocation8 + $0x20] sm:$0xf]
    %v348 = vld [vmem:[#allocation8 + $0x24] sm:$0xf]
    %v349 = vld [vmem:[#allocation8 + $0x28] sm:$0xf]
    %v350 = vld [vmem:[#allocation8 + $0x2c] sm:$0xf]
    %v351 = vld [vmem:[#allocation8 + $0x30] sm:$0xf]
    %v352 = vld [vmem:[#allocation8 + $0x34] sm:$0xf]
    %v353 = vld [vmem:[#allocation8 + $0x38] sm:$0xf]
    %v354 = vld [vmem:[#allocation8 + $0x3c] sm:$0xf]
    %v355 = vld [vmem:[%s6] sm:$0x1]
    %v357 = vperm.slane %v355, 0
    %v375 = vunpack.c.l.b16 %v339
    %v376 = vunpack.c.l.b16 %v340
    %v377 = vunpack.c.l.b16 %v341
    %v378 = vunpack.c.l.b16 %v342
    %v379 = vunpack.c.l.b16 %v343
    %v380 = vunpack.c.l.b16 %v344
    %v381 = vunpack.c.l.b16 %v345
    %v382 = vunpack.c.l.b16 %v346
    %v383 = vunpack.c.l.b16 %v347
    %v384 = vunpack.c.l.b16 %v348
    %v385 = vunpack.c.l.b16 %v349
    %v386 = vunpack.c.l.b16 %v350
    %v387 = vunpack.c.l.b16 %v351
    %v388 = vunpack.c.l.b16 %v352
    %v389 = vunpack.c.l.b16 %v353
    %v390 = vunpack.c.l.b16 %v354
    %v391 = vpack.c.b16 %v376, %v375
    %v392 = vpack.c.b16 %v378, %v377
    %v393 = vpack.c.b16 %v380, %v379
    %v394 = vpack.c.b16 %v382, %v381
    %v395 = vpack.c.b16 %v384, %v383
    %v396 = vpack.c.b16 %v386, %v385
    %v397 = vpack.c.b16 %v388, %v387
    %v398 = vpack.c.b16 %v390, %v389
    %407 = vmatpush.bf16.msra.mxu0 %v398
    %408 = vmatpush.bf16.msra.mxu0 %v397
    %409 = vmatpush.bf16.msra.mxu0 %v396
    %410 = vmatpush.bf16.msra.mxu0 %v395
    %411 = vmatpush.bf16.msra.mxu0 %v394
    %412 = vmatpush.bf16.msra.mxu0 %v393
    %413 = vmatpush.bf16.msra.mxu0 %v392
    %414 = vmatpush.bf16.msra.mxu0 %v391
    %415 = vmatmul.bf16.gmra.mxu0 %v338
    %v416 = vpop.f32.mrf.mxu0
    %v417 = vadd.f32 %v357, %v416
    %v418 = vpop.f32.mrf.mxu0
    %419 = vdwg.mxu0
    %420 = vst [vmem:[#allocation10] sm:$0xff] %v417
    // Predicated region
    $region46: #{tpu_custom_call.1} parent=1 // pred_check
      _
    $region47: #{tpu_custom_call.1} parent=1 // pred_check_branch
      %422 = sbr.rel (0) target = $region49
    $region48: #{tpu_custom_call.1} parent=1 // pred_region
      %424 = vsyncadd [#allocation4], 0
      %s426 = sshll.u32 [#allocation10], 4
      %s427 = int_to_ptr.vmem [resolvable:$true] %s426
      %s428 = sshll.u32 %s7, 4
      %s429 = int_to_ptr.hbm [resolvable:$true] %s428
      %431 = dma.vmem_to_hbm [thread:$0]  %s427, 128, %s429, [#allocation4]
    $region49: #{tpu_custom_call.1} parent=1 // pred_fallthru
      _
    // Predicated region
    $region50: #{tpu_custom_call.1} parent=1 // pred_check
      _
    $region51: #{tpu_custom_call.1} parent=1 // pred_check_branch
      %433 = sbr.rel (0) target = $region53
    $region52: #{tpu_custom_call.1} parent=1 // pred_region
      %435 = dma.done [#allocation4], 128
    $region53: #{tpu_custom_call.1} parent=1 // pred_fallthru
      _
    %436 = vsyncpa [#allocation3], 1
    %437 = vsyncpa [#allocation6], 1
    %438 = vsyncpa [#allocation9], 1
    %439 = vsyncpa [#allocation4], 1

</llo_original>
